<compile_context>
chip_gen: v7x
topology: tpu7x:2x2x1
jax: 0.10.0
libtpu: 0.0.40
codegen_flags: <defaults>
</compile_context>

<pallas_src>
import functools

import jax
import jax.numpy as jnp
from jax import lax
from jax.experimental import pallas as pl
from jax.experimental.pallas import tpu as pltpu

BN_EPS = 1e-5
# Explicit scoped-VMEM budget: well under v7x's 64 MiB physical and safe on
# v5e/v6e (128 MiB physical); our per-call working sets are a few MiB.
VMEM_LIMIT = 32 * 1024 * 1024


# ---------------------------------------------------------------------------
# Pallas kernel 1: implicit-GEMM convolution + fused BatchNorm batch stats
# ---------------------------------------------------------------------------
def _conv_stats_kernel(x_ref, w_ref, y_ref, s_ref, q_ref, *,
                       kk, kw, Wp, Wo, Lm, shifted):
    """Per-image conv-as-matmul with the BN sum / sum-of-squares epilogue fused.

    shifted=True : x_ref is one zero-padded image flattened over (H, W), block
                   (1, Lx, Cin) bf16, kept VMEM-resident across cout tiles.
                   Each kernel offset (i, j) is read as a shifted slab of
                   Lm = Ho*Wp rows directly from VMEM -> no im2col in HBM.
                   Output rows with (r % Wp) >= Wo are wrap-around junk and are
                   masked out of the statistics (and dropped later).
    shifted=False: x_ref is a pre-extracted patch block (1, M, kk*Cin) bf16,
                   single MXU dot (used for stride>1 convs and the 3-channel stem).
    """
    if shifted:
        acc = None
        for q in range(kk):                       # static unroll over kh*kw
            i, j = q // kw, q % kw
            a = x_ref[0, pl.ds(i * Wp + j, Lm), :]            # (Lm, Cin) bf16
            c = jnp.dot(a, w_ref[q], preferred_element_type=jnp.float32)
            acc = c if acc is None else acc + c
    else:
        acc = jnp.dot(x_ref[0], w_ref[...], preferred_element_type=jnp.float32)

    y_ref[0] = acc                                            # (Lm, tn) f32

    if shifted and Wp != Wo:
        r = lax.broadcasted_iota(jnp.int32, (Lm, 1), 0)
        ym = jnp.where((r % Wp) < Wo, acc, 0.0)
    else:
        ym = acc
    s_ref[0] = jnp.sum(ym, axis=0, keepdims=True)             # (1, tn) f32
    q_ref[0] = jnp.sum(ym * ym, axis=0, keepdims=True)


# ---------------------------------------------------------------------------
# Pallas kernel 2: fused BN affine (+ residual) (+ ReLU), bf16 output
# ---------------------------------------------------------------------------
def _affine_kernel(y_ref, s_ref, b_ref, o_ref, *, relu):
    v = y_ref[0] * s_ref[0] + b_ref[0]
    if relu:
        v = jnp.maximum(v, 0.0)
    o_ref[0] = v.astype(o_ref.dtype)


def _affine_res_kernel(y_ref, s_ref, b_ref, r_ref, o_ref, *, relu):
    v = y_ref[0] * s_ref[0] + b_ref[0] + r_ref[0].astype(jnp.float32)
    if relu:
        v = jnp.maximum(v, 0.0)
    o_ref[0] = v.astype(o_ref.dtype)


def pallas_affine(y, scale, bias, residual=None, relu=False):
    """y: (N, R, C) f32 -> relu(y*scale + bias [+ residual]) as (N, R, C) bf16."""
    N, R, C = y.shape
    scale = scale.reshape(1, 1, C).astype(jnp.float32)
    bias = bias.reshape(1, 1, C).astype(jnp.float32)

    # Lane-density fold: for C < 128 pack several rows into one 128-wide lane
    # group so stores are full-lane vst instead of masked partial stores.
    fold = 1
    if C < 128 and 128 % C == 0 and R % (128 // C) == 0:
        fold = 128 // C
        y = y.reshape(N, R // fold, C * fold)
        scale = jnp.tile(scale, (1, 1, fold))
        bias = jnp.tile(bias, (1, 1, fold))
        if residual is not None:
            residual = residual.reshape(N, R // fold, C * fold)

    Nf, Rf, Cf = y.shape
    TR = min(Rf, 1024)                 # row tile; ragged last block is masked
    nt = pl.cdiv(Rf, TR)
    row_spec = pl.BlockSpec((1, TR, Cf), lambda n, t: (n, t, 0))
    vec_spec = pl.BlockSpec((1, 1, Cf), lambda n, t: (0, 0, 0))
    cp = pltpu.CompilerParams(dimension_semantics=("parallel", "parallel"),
                              vmem_limit_bytes=VMEM_LIMIT)

    if residual is None:
        out = pl.pallas_call(
            functools.partial(_affine_kernel, relu=relu),
            out_shape=jax.ShapeDtypeStruct((Nf, Rf, Cf), jnp.bfloat16),
            grid=(Nf, nt),
            in_specs=[row_spec, vec_spec, vec_spec],
            out_specs=row_spec,
            compiler_params=cp,
        )(y, scale, bias)
    else:
        out = pl.pallas_call(
            functools.partial(_affine_res_kernel, relu=relu),
            out_shape=jax.ShapeDtypeStruct((Nf, Rf, Cf), jnp.bfloat16),
            grid=(Nf, nt),
            in_specs=[row_spec, vec_spec, vec_spec, row_spec],
            out_specs=row_spec,
            compiler_params=cp,
        )(y, scale, bias, residual.astype(jnp.bfloat16))
    return out.reshape(N, R, C)


# ---------------------------------------------------------------------------
# Pallas kernel 3: fused global-average-pool + FC matmul + bias
# ---------------------------------------------------------------------------
def _gap_fc_kernel(x_ref, w_ref, b_ref, o_ref):
    feats = x_ref[...].astype(jnp.float32)            # (N, L, C)
    pooled = jnp.mean(feats, axis=1)                  # (N, C) f32
    o_ref[...] = (jnp.dot(pooled.astype(jnp.bfloat16), w_ref[...],
                          preferred_element_type=jnp.float32)
                  + b_ref[...])


def pallas_gap_fc(feats, w, b):
    """feats: (N, L, C) bf16; w: (C, nc) f32; b: (nc,) f32 -> (N, nc) f32 logits."""
    N, L, C = feats.shape
    nc = w.shape[1]
    return pl.pallas_call(
        _gap_fc_kernel,
        out_shape=jax.ShapeDtypeStruct((N, nc), jnp.float32),
        grid=(1,),
        in_specs=[pl.BlockSpec((N, L, C), lambda i: (0, 0, 0)),
                  pl.BlockSpec((C, nc), lambda i: (0, 0)),
                  pl.BlockSpec((1, nc), lambda i: (0, 0))],
        out_specs=pl.BlockSpec((N, nc), lambda i: (0, 0)),
        compiler_params=pltpu.CompilerParams(vmem_limit_bytes=VMEM_LIMIT),
    )(feats, w.astype(jnp.bfloat16), b.reshape(1, nc).astype(jnp.float32))


# ---------------------------------------------------------------------------
# Glue: conv+BN block, ResBlock, full ResNet34
# ---------------------------------------------------------------------------
def conv_bn(x, w_kio, gamma, beta, *, ksize, stride, pad, relu, residual=None):
    """conv(bias=False) -> BatchNorm2d(batch stats) -> [+residual] -> [ReLU].

    x: (N, H, W, Cin) bf16; w_kio: (ksize*ksize, Cin, Cout) bf16.
    Returns (N, Ho, Wo, Cout) bf16.
    """
    N, H, W, Cin = x.shape
    kk, _, Cout = w_kio.shape
    kh = kw = ksize
    assert kh * kw == kk
    Ho = (H + 2 * pad - kh) // stride + 1
    Wo = (W + 2 * pad - kw) // stride + 1
    tn = 256 if (Cout % 256 == 0) else Cout        # cout tile (splits 512 -> 2)
    nj = Cout // tn

    shifted = (stride == 1 and Cin >= 16)
    if shifted:
        # Implicit GEMM: one zero-padded image (plus one extra zero row so every
        # shifted slab stays in bounds) flattened over (H, W), resident in VMEM.
        Hp, Wp = H + 2 * pad, W + 2 * pad
        Lm = Ho * Wp                               # padded-pitch output rows
        xp = jnp.pad(x, ((0, 0), (pad, pad + 1), (pad, pad), (0, 0)))
        x_in = xp.reshape(N, (Hp + 1) * Wp, Cin)
        w_in = w_kio                               # (kk, Cin, Cout) bf16
        in_specs = [
            pl.BlockSpec((1, (Hp + 1) * Wp, Cin), lambda n, j: (n, 0, 0)),
            pl.BlockSpec((kk, Cin, tn), lambda n, j: (0, 0, j)),
        ]
    else:
        # TODO(synk): stride>1 convs (and the 3-channel stem) still pre-extract
        # strided patch slabs in XLA (modest expansion, bf16); a strided-DMA
        # implicit-GEMM variant would remove even that copy.
        Wp = Wo
        Lm = Ho * Wo
        xp = jnp.pad(x, ((0, 0), (pad, pad), (pad, pad), (0, 0)))
        slabs = [xp[:, i:i + stride * Ho:stride, j:j + stride * Wo:stride, :]
                 for i in range(kh) for j in range(kw)]
        patches = jnp.stack(slabs, axis=3)         # (N, Ho, Wo, kk, Cin)
        x_in = patches.reshape(N, Lm, kk * Cin)
        w_in = w_kio.reshape(kk * Cin, Cout)
        in_specs = [
            pl.BlockSpec((1, Lm, kk * Cin), lambda n, j: (n, 0, 0)),
            pl.BlockSpec((kk * Cin, tn), lambda n, j: (0, j)),
        ]

    kern = functools.partial(_conv_stats_kernel, kk=kk, kw=kw, Wp=Wp, Wo=Wo,
                             Lm=Lm, shifted=shifted)
    # TODO(synk): per-image whole-row blocks assume CIFAR-scale spatial dims;
    # very large feature maps would need an additional row-tiling grid axis.
    y, s_img, q_img = pl.pallas_call(
        kern,
        out_shape=(jax.ShapeDtypeStruct((N, Lm, Cout), jnp.float32),
                   jax.ShapeDtypeStruct((N, 1, Cout), jnp.float32),
                   jax.ShapeDtypeStruct((N, 1, Cout), jnp.float32)),
        grid=(N, nj),
        in_specs=in_specs,
        out_specs=(pl.BlockSpec((1, Lm, tn), lambda n, j: (n, 0, j)),
                   pl.BlockSpec((1, 1, tn), lambda n, j: (n, 0, j)),
                   pl.BlockSpec((1, 1, tn), lambda n, j: (n, 0, j))),
        compiler_params=pltpu.CompilerParams(
            dimension_semantics=("parallel", "parallel"),
            vmem_limit_bytes=VMEM_LIMIT),
    )(x_in, w_in)

    # BN batch statistics (train-mode, biased variance), f32.
    m = float(N * Ho * Wo)
    ssum = jnp.sum(s_img, axis=(0, 1))
    sqsum = jnp.sum(q_img, axis=(0, 1))
    mean = ssum / m
    var = jnp.maximum(sqsum / m - mean * mean, 0.0)
    scale = gamma / jnp.sqrt(var + BN_EPS)
    bias = beta - mean * scale

    res = None
    if residual is not None:
        res = residual
        if shifted and Wp != Wo:                   # match padded-pitch row layout
            res = jnp.pad(res, ((0, 0), (0, 0), (0, Wp - Wo), (0, 0)))
        res = res.reshape(N, Lm, Cout)

    out = pallas_affine(y, scale, bias, residual=res, relu=relu)  # bf16
    out = out.reshape(N, Ho, Wp, Cout)
    if Wp != Wo:
        out = out[:, :, :Wo, :]                    # drop padded-pitch junk cols
    return out


def init_conv(key, kh, kw, cin, cout):
    fan_in = kh * kw * cin
    w = jax.random.normal(key, (kh, kw, cin, cout), jnp.float32) * jnp.sqrt(2.0 / fan_in)
    # Pre-reshape + pre-cast once at init: (kh*kw, cin, cout) bf16 (MXU-native).
    return w.reshape(kh * kw, cin, cout).astype(jnp.bfloat16)


def init_resblock(key, cin, cout, stride):
    k1, k2, k3 = jax.random.split(key, 3)
    p = {
        "w1": init_conv(k1, 3, 3, cin, cout),
        "g1": jnp.ones((cout,), jnp.float32), "b1": jnp.zeros((cout,), jnp.float32),
        "w2": init_conv(k2, 3, 3, cout, cout),
        "g2": jnp.ones((cout,), jnp.float32), "b2": jnp.zeros((cout,), jnp.float32),
        "stride": stride,
    }
    if stride != 1 or cin != cout:
        p["ws"] = init_conv(k3, 1, 1, cin, cout)
        p["gs"] = jnp.ones((cout,), jnp.float32)
        p["bs"] = jnp.zeros((cout,), jnp.float32)
    return p


def resblock_forward(p, x):
    stride = p["stride"]
    h = conv_bn(x, p["w1"], p["g1"], p["b1"], ksize=3, stride=stride, pad=1, relu=True)
    if "ws" in p:
        sc = conv_bn(x, p["ws"], p["gs"], p["bs"], ksize=1, stride=stride, pad=0,
                     relu=False)
    else:
        sc = x
    # second conv + BN; residual add and final ReLU fused into the affine kernel
    return conv_bn(h, p["w2"], p["g2"], p["b2"], ksize=3, stride=1, pad=1,
                   relu=True, residual=sc)


def init_resnet34(key, in_channel=3, num_classes=10, first_lay_kernel_size=5):
    keys = jax.random.split(key, 8)
    params = {
        "conv1_w": init_conv(keys[0], first_lay_kernel_size, first_lay_kernel_size,
                             in_channel, 64),
        "conv1_g": jnp.ones((64,), jnp.float32),
        "conv1_b": jnp.zeros((64,), jnp.float32),
    }
    cfg = [(64, 3, 2), (128, 4, 2), (256, 6, 2), (512, 3, 2)]
    inch = 64
    lays = []
    for li, (ch, nb, st) in enumerate(cfg):
        strides = [st] + [1] * (nb - 1)
        bkeys = jax.random.split(keys[1 + li], nb)
        blocks = []
        for bi, s in enumerate(strides):
            blocks.append(init_resblock(bkeys[bi], inch, ch, s))
            inch = ch
        lays.append(blocks)
    params["lays"] = lays
    params["fc_w"] = jax.random.normal(keys[5], (512, num_classes), jnp.float32) / jnp.sqrt(512.0)
    params["fc_b"] = jnp.zeros((num_classes,), jnp.float32)
    return params


def resnet34_forward(params, x_nchw, first_lay_kernel_size=5, first_lay_stride=1,
                     first_lay_padding=2):
    x = jnp.transpose(x_nchw, (0, 2, 3, 1)).astype(jnp.bfloat16)  # NCHW -> NHWC bf16
    out = conv_bn(x, params["conv1_w"], params["conv1_g"], params["conv1_b"],
                  ksize=first_lay_kernel_size, stride=first_lay_stride,
                  pad=first_lay_padding, relu=True)
    for blocks in params["lays"]:
        for p in blocks:
            out = resblock_forward(p, out)
    # AdaptiveAvgPool2d(1) + Flatten + Linear fused into one Pallas kernel.
    N, Hf, Wf, C = out.shape
    logits = pallas_gap_fc(out.reshape(N, Hf * Wf, C), params["fc_w"], params["fc_b"])
    return logits


if __name__ == "__main__":
    key = jax.random.PRNGKey(0)
    pk, xk = jax.random.split(key)
    params = init_resnet34(pk, in_channel=3, num_classes=10)
    x = jax.random.normal(xk, (2, 3, 16, 16), jnp.float32)  # NCHW, like PyTorch input
    logits = resnet34_forward(params, x)
    jax.block_until_ready(logits)
    assert logits.shape == (2, 10)
    print("KERNEL_OK")
</pallas_src>

<mosaic_0001>
module attributes {stable_mosaic.version = 11 : i64} {
  func.func @_conv_stats_kernel(%arg0: i32, %arg1: i32, %arg2: memref<1x256x75xbf16, #tpu.memory_space<vmem>>, %arg3: memref<75x64xbf16, #tpu.memory_space<vmem>>, %arg4: memref<1x256x64xf32, #tpu.memory_space<vmem>>, %arg5: memref<1x1x64xf32, #tpu.memory_space<vmem>>, %arg6: memref<1x1x64xf32, #tpu.memory_space<vmem>>) attributes {dimension_semantics = [#tpu.dimension_semantics<parallel>, #tpu.dimension_semantics<parallel>], iteration_bounds = array<i64: 2, 1>, scalar_prefetch = 0 : i64, scratch_operands = 0 : i64, tpu.core_type = #tpu.core_type<tc>, window_params = [{transform_indices = @transform_0, window_bounds = array<i64: 1, 256, 75>}, {transform_indices = @transform_1, window_bounds = array<i64: 75, 64>}, {transform_indices = @transform_2, window_bounds = array<i64: 1, 256, 64>}, {transform_indices = @transform_3, window_bounds = array<i64: 1, 1, 64>}, {transform_indices = @transform_4, window_bounds = array<i64: 1, 1, 64>}]} {
    %c0 = arith.constant 0 : index
    %c0_0 = arith.constant 0 : index
    %c0_1 = arith.constant 0 : index
    %0 = vector.load %arg2[%c0, %c0_0, %c0_1] : memref<1x256x75xbf16, #tpu.memory_space<vmem>>, vector<1x256x75xbf16>
    %1 = vector.shape_cast %0 : vector<1x256x75xbf16> to vector<256x75xbf16>
    %c0_2 = arith.constant 0 : index
    %c0_3 = arith.constant 0 : index
    %2 = vector.load %arg3[%c0_2, %c0_3] : memref<75x64xbf16, #tpu.memory_space<vmem>>, vector<75x64xbf16>
    %cst = arith.constant dense<0.000000e+00> : vector<256x64xf32>
    %3 = tpu.matmul %1, %2, %cst {dimension_numbers = #tpu.dot_dimension_numbers<[1], [0], [0], [1], [0, 0, 1, 1], [], []>} : vector<256x75xbf16>, vector<75x64xbf16>, vector<256x64xf32> -> vector<256x64xf32>
    %c0_4 = arith.constant 0 : index
    %c0_5 = arith.constant 0 : index
    %c0_6 = arith.constant 0 : index
    %4 = vector.load %arg4[%c0_4, %c0_5, %c0_6] : memref<1x256x64xf32, #tpu.memory_space<vmem>>, vector<1x256x64xf32>
    %5 = vector.shape_cast %4 : vector<1x256x64xf32> to vector<256x64xf32>
    %6 = vector.shape_cast %3 : vector<256x64xf32> to vector<1x256x64xf32>
    tpu.vector_store %arg4[%c0_4, %c0_5, %c0_6], %6 {strides = array<i32>} : memref<1x256x64xf32, #tpu.memory_space<vmem>>, vector<1x256x64xf32>,
    %cst_7 = arith.constant dense<0.000000e+00> : vector<64xf32>
    %7 = vector.multi_reduction <add>, %3, %cst_7 [0] : vector<256x64xf32> to vector<64xf32>
    %8 = vector.shape_cast %7 : vector<64xf32> to vector<1x64xf32>
    %c0_8 = arith.constant 0 : index
    %c0_9 = arith.constant 0 : index
    %c0_10 = arith.constant 0 : index
    %9 = vector.load %arg5[%c0_8, %c0_9, %c0_10] : memref<1x1x64xf32, #tpu.memory_space<vmem>>, vector<1x1x64xf32>
    %10 = vector.shape_cast %9 : vector<1x1x64xf32> to vector<1x64xf32>
    %11 = vector.shape_cast %8 : vector<1x64xf32> to vector<1x1x64xf32>
    tpu.vector_store %arg5[%c0_8, %c0_9, %c0_10], %11 {strides = array<i32>} : memref<1x1x64xf32, #tpu.memory_space<vmem>>, vector<1x1x64xf32>,
    %12 = arith.mulf %3, %3 : vector<256x64xf32>
    %cst_11 = arith.constant dense<0.000000e+00> : vector<64xf32>
    %13 = vector.multi_reduction <add>, %12, %cst_11 [0] : vector<256x64xf32> to vector<64xf32>
    %14 = vector.shape_cast %13 : vector<64xf32> to vector<1x64xf32>
    %c0_12 = arith.constant 0 : index
    %c0_13 = arith.constant 0 : index
    %c0_14 = arith.constant 0 : index
    %15 = vector.load %arg6[%c0_12, %c0_13, %c0_14] : memref<1x1x64xf32, #tpu.memory_space<vmem>>, vector<1x1x64xf32>
    %16 = vector.shape_cast %15 : vector<1x1x64xf32> to vector<1x64xf32>
    %17 = vector.shape_cast %14 : vector<1x64xf32> to vector<1x1x64xf32>
    tpu.vector_store %arg6[%c0_12, %c0_13, %c0_14], %17 {strides = array<i32>} : memref<1x1x64xf32, #tpu.memory_space<vmem>>, vector<1x1x64xf32>,
    return
  }
  func.func @transform_0(%arg0: i32, %arg1: i32) -> (i32, i32, i32) {
    %c0_i32 = arith.constant 0 : i32
    %c0_i32_0 = arith.constant 0 : i32
    %c0_i32_1 = arith.constant 0 : i32
    return %arg0, %c0_i32, %c0_i32_0 : i32, i32, i32
  }
  func.func @transform_1(%arg0: i32, %arg1: i32) -> (i32, i32) {
    %c0_i32 = arith.constant 0 : i32
    %c0_i32_0 = arith.constant 0 : i32
    return %c0_i32, %arg1 : i32, i32
  }
  func.func @transform_2(%arg0: i32, %arg1: i32) -> (i32, i32, i32) {
    %c0_i32 = arith.constant 0 : i32
    %c0_i32_0 = arith.constant 0 : i32
    return %arg0, %c0_i32, %arg1 : i32, i32, i32
  }
  func.func @transform_3(%arg0: i32, %arg1: i32) -> (i32, i32, i32) {
    %c0_i32 = arith.constant 0 : i32
    %c0_i32_0 = arith.constant 0 : i32
    return %arg0, %c0_i32, %arg1 : i32, i32, i32
  }
  func.func @transform_4(%arg0: i32, %arg1: i32) -> (i32, i32, i32) {
    %c0_i32 = arith.constant 0 : i32
    %c0_i32_0 = arith.constant 0 : i32
    return %arg0, %c0_i32, %arg1 : i32, i32, i32
  }
}

</mosaic_0001>

<llo_original>
// kernel: tpu_custom_call.1
$region0: #{tpu_custom_call.1}
  #allocation0 [shape = 'u32[]', space=smem, size = 0x4, offset = 0x4, fixed_abs, tag = 'smem constant byte address 0x4 - core index']
  #allocation1 [shape = 'u32[144,128]{1,0:T(1,128)}', space=vmem, size = 0x12000, scoped, tag = 'internal scratch']
  %s0 = inlined_call_operand.vmem [shape: bf16[2,256,75], index: 0, kind: input, shape index: {}]
  %s1 = inlined_call_operand.vmem [shape: bf16[75,64], index: 1, kind: input, shape index: {}]
  %s2 = inlined_call_operand.vmem [shape: f32[2,256,64], index: 2, kind: output, shape index: {0}]
  %s3 = inlined_call_operand.hbm [shape: f32[2,1,64], index: 3, kind: output, shape index: {1}]
  %s4 = inlined_call_operand.hbm [shape: f32[2,1,64], index: 4, kind: output, shape index: {2}]
  %5 = xla_tuple %s2, %s3, %s4
  %s6 = sld [smem:[#allocation0]]
  $region57: #{tpu_custom_call.1} parent=0
    _
  %s8 = ssub.s32 1, %s6
  %s9 = scalar_select 0, %s8, %s6
  $region1: #{tpu_custom_call.1} parent=0
    #allocation2 [shape = 'u8[1024]{0}', space=vmem, size = 0x400, scoped, tag = 'output window, operand 1']
    #allocation3 [shape = 's32[2]{0}', space=sflag, size = 0x8, scoped, tag = 'scoped memory for tpu_custom_call.1']
    #allocation4 [shape = 'u8[1024]{0}', space=vmem, size = 0x400, scoped, tag = 'output window, operand 2']
    #allocation5 [shape = 's32[2]{0}', space=sflag, size = 0x8, scoped, tag = 'scoped memory for tpu_custom_call.1']
    %10 = vsyncpa [#allocation3], 0
    %s11 = scalar_lea.sflag [#allocation3], 1
    %12 = vsyncpa %s11, 0
    %13 = vsyncpa [#allocation5], 0
    %s14 = scalar_lea.sflag [#allocation5], 1
    %15 = vsyncpa %s14, 0
    loop: start=0, step=1, limit=4
    $region2: #{tpu_custom_call.1} parent=1 // loop_pre_header
      _
    $region3: #{tpu_custom_call.1} parent=1 // loop_header
      %s17 = sphi 0, %s21
      %p18 = scmp.ge.s32.totalorder %s17, 4
      %s24 = sphi 0, %s36
      %s25 = sphi 0, %s32
      %s26 = sphi 0, %s24
      %s27 = sphi 0, %s25
      %s28 = sphi 0, %s26
      %s29 = sphi 0, %s27
      %s39 = sphi 0, %s41
      %s42 = sphi 0, %s39
      %s43 = sphi 0, %s42
      %s59 = sphi 0, %s43
      %s65 = sphi 0, %s67
      %s68 = sphi 0, %s65
      %s69 = sphi 0, %s68
      %s85 = sphi 0, %s69
      %s93 = sphi 0, %s95
      %s96 = sphi 0, %s93
      %s97 = sphi 0, %s96
      %s113 = sphi 0, %s97
      %s121 = sphi 0, %s123
      %s124 = sphi 0, %s121
      %s125 = sphi 0, %s124
      %s141 = sphi 0, %s125
      %s149 = sphi 0, %s151
      %s152 = sphi 0, %s149
      %s153 = sphi 0, %s152
      %s169 = sphi 0, %s153
    $region4: #{tpu_custom_call.1} parent=1 // loop_header_branch
      %20 = sbr.rel (%p18) target = $region8
    $region5: #{tpu_custom_call.1} parent=1 // loop_body
      %s22 = ssub.s32 %s17, 1
      %s23 = ssub.s32 %s17, 2
      %s30 = sadd.s32 1, %s25
      %p31 = scmp.ge.s32.totalorder %s30, 1
      %s32 = scalar_select %p31, 0, %s30
      %s33 = sadd.s32 1, %s24
      %s34 = scalar_select %p31, %s33, %s24
      %p35 = scmp.ge.s32.totalorder %s34, 2
      %s36 = scalar_select %p35, 0, %s34
      %s37 = ssub.s32 %s24, %s36
      %p38 = scmp.eq.s32.totalorder %s37, 0
      %s40 = sadd.s32 %s39, 1
      %s41 = scalar_select %p38, %s39, %s40
      %p44 = pneg %p38
      %p45 = scmp.eq.s32.totalorder %s17, 1
      %p46 = por %p44, %p45
      %p47 = scmp.ne.s32.totalorder %s39, %s42
      %p48 = scmp.eq.s32.totalorder %s17, 0
      %p49 = por %p47, %p48
      %p50 = scmp.ne.s32.totalorder %s39, %s42
      %p51 = scmp.eq.s32.totalorder %s22, 1
      %p52 = por %p50, %p51
      %p53 = scmp.ne.s32.totalorder %s42, %s43
      %p54 = scmp.eq.s32.totalorder %s22, 0
      %p55 = por %p53, %p54
      %p56 = scmp.ne.s32.totalorder %s42, %s43
      %p57 = scmp.eq.s32.totalorder %s23, 1
      %p58 = por %p56, %p57
      %p60 = scmp.ne.s32.totalorder %s43, %s59
      %p61 = scmp.eq.s32.totalorder %s23, 0
      %p62 = por %p60, %p61
      %s63 = ssub.s32 %s25, %s32
      %p64 = scmp.eq.s32.totalorder %s63, 0
      %s66 = sadd.s32 %s65, 1
      %s67 = scalar_select %p64, %s65, %s66
      %p70 = pneg %p64
      %p71 = scmp.eq.s32.totalorder %s17, 1
      %p72 = por %p70, %p71
      %p73 = scmp.ne.s32.totalorder %s65, %s68
      %p74 = scmp.eq.s32.totalorder %s17, 0
      %p75 = por %p73, %p74
      %p76 = scmp.ne.s32.totalorder %s65, %s68
      %p77 = scmp.eq.s32.totalorder %s22, 1
      %p78 = por %p76, %p77
      %p79 = scmp.ne.s32.totalorder %s68, %s69
      %p80 = scmp.eq.s32.totalorder %s22, 0
      %p81 = por %p79, %p80
      %p82 = scmp.ne.s32.totalorder %s68, %s69
      %p83 = scmp.eq.s32.totalorder %s23, 1
      %p84 = por %p82, %p83
      %p86 = scmp.ne.s32.totalorder %s69, %s85
      %p87 = scmp.eq.s32.totalorder %s23, 0
      %p88 = por %p86, %p87
      %s89 = ssub.s32 %s24, %s36
      %s90 = ssub.s32 %s25, %s32
      %s91 = sor.u32 %s89, %s90
      %p92 = scmp.eq.s32.totalorder %s91, 0
      %s94 = sadd.s32 %s93, 1
      %s95 = scalar_select %p92, %s93, %s94
      %p98 = pneg %p92
      %p99 = scmp.eq.s32.totalorder %s17, 1
      %p100 = por %p98, %p99
      %p101 = scmp.ne.s32.totalorder %s93, %s96
      %p102 = scmp.eq.s32.totalorder %s17, 0
      %p103 = por %p101, %p102
      %p104 = scmp.ne.s32.totalorder %s93, %s96
      %p105 = scmp.eq.s32.totalorder %s22, 1
      %p106 = por %p104, %p105
      %p107 = scmp.ne.s32.totalorder %s96, %s97
      %p108 = scmp.eq.s32.totalorder %s22, 0
      %p109 = por %p107, %p108
      %p110 = scmp.ne.s32.totalorder %s96, %s97
      %p111 = scmp.eq.s32.totalorder %s23, 1
      %p112 = por %p110, %p111
      %p114 = scmp.ne.s32.totalorder %s97, %s113
      %p115 = scmp.eq.s32.totalorder %s23, 0
      %p116 = por %p114, %p115
      %s117 = ssub.s32 %s24, %s36
      %s118 = ssub.s32 %s25, %s32
      %s119 = sor.u32 %s117, %s118
      %p120 = scmp.eq.s32.totalorder %s119, 0
      %s122 = sadd.s32 %s121, 1
      %s123 = scalar_select %p120, %s121, %s122
      %p126 = pneg %p120
      %p127 = scmp.eq.s32.totalorder %s17, 1
      %p128 = por %p126, %p127
      %p129 = scmp.ne.s32.totalorder %s121, %s124
      %p130 = scmp.eq.s32.totalorder %s17, 0
      %p131 = por %p129, %p130
      %p132 = scmp.ne.s32.totalorder %s121, %s124
      %p133 = scmp.eq.s32.totalorder %s22, 1
      %p134 = por %p132, %p133
      %p135 = scmp.ne.s32.totalorder %s124, %s125
      %p136 = scmp.eq.s32.totalorder %s22, 0
      %p137 = por %p135, %p136
      %p138 = scmp.ne.s32.totalorder %s124, %s125
      %p139 = scmp.eq.s32.totalorder %s23, 1
      %p140 = por %p138, %p139
      %p142 = scmp.ne.s32.totalorder %s125, %s141
      %p143 = scmp.eq.s32.totalorder %s23, 0
      %p144 = por %p142, %p143
      %s145 = ssub.s32 %s24, %s36
      %s146 = ssub.s32 %s25, %s32
      %s147 = sor.u32 %s145, %s146
      %p148 = scmp.eq.s32.totalorder %s147, 0
      %s150 = sadd.s32 %s149, 1
      %s151 = scalar_select %p148, %s149, %s150
      %p154 = pneg %p148
      %p155 = scmp.eq.s32.totalorder %s17, 1
      %p156 = por %p154, %p155
      %p157 = scmp.ne.s32.totalorder %s149, %s152
      %p158 = scmp.eq.s32.totalorder %s17, 0
      %p159 = por %p157, %p158
      %p160 = scmp.ne.s32.totalorder %s149, %s152
      %p161 = scmp.eq.s32.totalorder %s22, 1
      %p162 = por %p160, %p161
      %p163 = scmp.ne.s32.totalorder %s152, %s153
      %p164 = scmp.eq.s32.totalorder %s22, 0
      %p165 = por %p163, %p164
      %p166 = scmp.ne.s32.totalorder %s152, %s153
      %p167 = scmp.eq.s32.totalorder %s23, 1
      %p168 = por %p166, %p167
      %p170 = scmp.ne.s32.totalorder %s153, %s169
      %p171 = scmp.eq.s32.totalorder %s23, 0
      %p172 = por %p170, %p171
      %p173 = scmp.le.s32.totalorder 1, %s17
      %p174 = scmp.lt.s32.totalorder %s17, 3
      %p175 = pnand %p173, %p174
      %p176 = pneg %p175
      // Predicated region
      $region9: #{tpu_custom_call.1} parent=5 // pred_check
        _
      $region10: #{tpu_custom_call.1} parent=5 // pred_check_branch
        %178 = sbr.rel (%p175) target = $region12
      $region11: #{tpu_custom_call.1} parent=5 // pred_region
        %s179 = ssub.s32 %s17, 1
        // Predicated region
        $region13: #{tpu_custom_call.1} parent=11 // pred_check
          %p180 = pneg %p81
        $region14: #{tpu_custom_call.1} parent=11 // pred_check_branch
          %182 = sbr.rel (%p180) target = $region16
        $region15: #{tpu_custom_call.1} parent=11 // pred_region
          %p183 = scmp.lt.s32.totalorder %s27, 0
          %s184 = scalar_select %p183, %s27, 0
          %s185 = smul.addr %s184, 4
          %s186 = scalar_lea.vmem %s1, %s185
        $region16: #{tpu_custom_call.1} parent=11 // pred_fallthru
          _
      $region12: #{tpu_custom_call.1} parent=5 // pred_fallthru
        _
      %p187 = scmp.lt.s32.totalorder %s17, 2
      // Predicated region
      $region17: #{tpu_custom_call.1} parent=5 // pred_check
        %p188 = pneg %p187
      $region18: #{tpu_custom_call.1} parent=5 // pred_check_branch
        %190 = sbr.rel (%p188) target = $region20
      $region19: #{tpu_custom_call.1} parent=5 // pred_region
        // Predicated region
        $region21: #{tpu_custom_call.1} parent=19 // pred_check
          %p191 = pneg %p49
        $region22: #{tpu_custom_call.1} parent=19 // pred_check_branch
          %193 = sbr.rel (%p191) target = $region24
        $region23: #{tpu_custom_call.1} parent=19 // pred_region
          %p194 = scmp.lt.s32.totalorder %s24, 1
          %s195 = scalar_select %p194, %s24, 1
          %s196 = smul.addr %s195, 32
          %s197 = smul.addr %s196, 4
          %s198 = scalar_lea.vmem %s0, %s197
        $region24: #{tpu_custom_call.1} parent=19 // pred_fallthru
          _
      $region20: #{tpu_custom_call.1} parent=5 // pred_fallthru
        _
      %p199 = scmp.le.s32.totalorder 1, %s17
      %p200 = scmp.lt.s32.totalorder %s17, 3
      %p201 = pnand %p199, %p200
      %p202 = pneg %p201
      // Predicated region
      $region25: #{tpu_custom_call.1} parent=5 // pred_check
        _
      $region26: #{tpu_custom_call.1} parent=5 // pred_check_branch
        %204 = sbr.rel (%p201) target = $region28
      $region27: #{tpu_custom_call.1} parent=5 // pred_region
        %s205 = ssub.s32 %s17, 1
        %p206 = scmp.lt.s32.totalorder %s26, 1
        %s207 = scalar_select %p206, %s26, 1
        %s208 = smul.addr %s207, 32
        %s209 = smul.addr %s208, 4
        %s210 = scalar_lea.vmem %s0, %s209
        %p211 = pneg %p55
        %p212 = pneg %p52
        %p213 = scmp.lt.s32.totalorder %s27, 0
        %s214 = scalar_select %p213, %s27, 0
        %s215 = smul.addr %s214, 4
        %s216 = scalar_lea.vmem %s1, %s215
        %p217 = pneg %p81
        %p218 = pneg %p78
        %p219 = pneg %p109
        %p220 = pneg %p106
        %p221 = scmp.lt.s32.totalorder %s26, 1
        %s222 = scalar_select %p221, %s26, 1
        %p223 = scmp.lt.s32.totalorder %s27, 0
        %s224 = scalar_select %p223, %s27, 0
        %s225 = smul.addr %s222, 32
        %s226 = sadd.s32 %s224, %s225
        %s227 = smul.addr %s226, 8
        %s228 = scalar_lea.vmem %s2, %s227
        %p229 = pneg %p137
        %p230 = pneg %p134
        %s231 = sand.u32 %s124, 1
        %s232 = scalar_lea.sflag [#allocation3], %s231
        %s233 = sand.u32 %s124, 1
        %s234 = scalar_lea.vmem [#allocation2], %s233
        %p235 = pneg %p165
        %p236 = pneg %p162
        %s237 = sand.u32 %s152, 1
        %s238 = scalar_lea.sflag [#allocation5], %s237
        %s239 = sand.u32 %s152, 1
        %s240 = scalar_lea.vmem [#allocation4], %s239
        %p241 = scmp.lt.s32.totalorder %s26, 1
        %s242 = scalar_select %p241, %s26, 1
        %s243 = smul.addr %s242, 32
        %s244 = smul.addr %s243, 4
        %s245 = scalar_lea.vmem %s0, %s244
        %p246 = scmp.lt.s32.totalorder %s27, 0
        %s247 = scalar_select %p246, %s27, 0
        %s248 = smul.addr %s247, 4
        %s249 = scalar_lea.vmem %s1, %s248
        %p250 = scmp.lt.s32.totalorder %s26, 1
        %s251 = scalar_select %p250, %s26, 1
        %p252 = scmp.lt.s32.totalorder %s27, 0
        %s253 = scalar_select %p252, %s27, 0
        %s254 = smul.addr %s251, 32
        %s255 = sadd.s32 %s253, %s254
        %s256 = smul.addr %s255, 8
        %s257 = scalar_lea.vmem %s2, %s256
        %v259 = vld [vmem:[%s245] sm:$0xf]
        %v260 = vld [vmem:[%s245 + $0x4] sm:$0xf]
        %v261 = vld [vmem:[%s245 + $0x8] sm:$0xf]
        %v262 = vld [vmem:[%s245 + $0xc] sm:$0xf]
        %v263 = vld [vmem:[%s245 + $0x10] sm:$0xf]
        %v264 = vld [vmem:[%s245 + $0x14] sm:$0xf]
        %v265 = vld [vmem:[%s245 + $0x18] sm:$0xf]
        %v266 = vld [vmem:[%s245 + $0x1c] sm:$0xf]
        %v267 = vld [vmem:[%s245 + $0x20] sm:$0xf]
        %v268 = vld [vmem:[%s245 + $0x24] sm:$0xf]
        %v269 = vld [vmem:[%s245 + $0x28] sm:$0xf]
        %v270 = vld [vmem:[%s245 + $0x2c] sm:$0xf]
        %v271 = vld [vmem:[%s245 + $0x30] sm:$0xf]
        %v272 = vld [vmem:[%s245 + $0x34] sm:$0xf]
        %v273 = vld [vmem:[%s245 + $0x38] sm:$0xf]
        %v274 = vld [vmem:[%s245 + $0x3c] sm:$0xf]
        %v275 = vld [vmem:[%s245 + $0x40] sm:$0xf]
        %v276 = vld [vmem:[%s245 + $0x44] sm:$0xf]
        %v277 = vld [vmem:[%s245 + $0x48] sm:$0xf]
        %v278 = vld [vmem:[%s245 + $0x4c] sm:$0xf]
        %v279 = vld [vmem:[%s245 + $0x50] sm:$0xf]
        %v280 = vld [vmem:[%s245 + $0x54] sm:$0xf]
        %v281 = vld [vmem:[%s245 + $0x58] sm:$0xf]
        %v282 = vld [vmem:[%s245 + $0x5c] sm:$0xf]
        %v283 = vld [vmem:[%s245 + $0x60] sm:$0xf]
        %v284 = vld [vmem:[%s245 + $0x64] sm:$0xf]
        %v285 = vld [vmem:[%s245 + $0x68] sm:$0xf]
        %v286 = vld [vmem:[%s245 + $0x6c] sm:$0xf]
        %v287 = vld [vmem:[%s245 + $0x70] sm:$0xf]
        %v288 = vld [vmem:[%s245 + $0x74] sm:$0xf]
        %v289 = vld [vmem:[%s245 + $0x78] sm:$0xf]
        %v290 = vld [vmem:[%s245 + $0x7c] sm:$0xf]
        %v291 = vld [vmem:[%s249] sm:$0xf]
        %v292 = vld [vmem:[%s249 + $0x4] sm:$0xf]
        %v293 = vld [vmem:[%s249 + $0x8] sm:$0xf]
        %v294 = vld [vmem:[%s249 + $0xc] sm:$0xf]
        %v295 = vld [vmem:[%s249 + $0x10] sm:$0xf]
        %v296 = vld [vmem:[%s249 + $0x14] sm:$0xf]
        %v297 = vld [vmem:[%s249 + $0x18] sm:$0xf]
        %v298 = vld [vmem:[%s249 + $0x1c] sm:$0xf]
        %v299 = vld [vmem:[%s249 + $0x20] sm:$0xf]
        %v300 = vld [vmem:[%s249 + $0x24] sm:$0x3]
        %v333 = vunpack.c.l.b16 %v259
        %v334 = vunpack.c.l.b16 %v260
        %v335 = vunpack.c.l.b16 %v261
        %v336 = vunpack.c.l.b16 %v262
        %v337 = vunpack.c.l.b16 %v263
        %v338 = vunpack.c.l.b16 %v264
        %v339 = vunpack.c.l.b16 %v265
        %v340 = vunpack.c.l.b16 %v266
        %v341 = vunpack.c.l.b16 %v267
        %v342 = vunpack.c.l.b16 %v268
        %v343 = vunpack.c.l.b16 %v269
        %v344 = vunpack.c.l.b16 %v270
        %v345 = vunpack.c.l.b16 %v271
        %v346 = vunpack.c.l.b16 %v272
        %v347 = vunpack.c.l.b16 %v273
        %v348 = vunpack.c.l.b16 %v274
        %v349 = vunpack.c.l.b16 %v275
        %v350 = vunpack.c.l.b16 %v276
        %v351 = vunpack.c.l.b16 %v277
        %v352 = vunpack.c.l.b16 %v278
        %v353 = vunpack.c.l.b16 %v279
        %v354 = vunpack.c.l.b16 %v280
        %v355 = vunpack.c.l.b16 %v281
        %v356 = vunpack.c.l.b16 %v282
        %v357 = vunpack.c.l.b16 %v283
        %v358 = vunpack.c.l.b16 %v284
        %v359 = vunpack.c.l.b16 %v285
        %v360 = vunpack.c.l.b16 %v286
        %v361 = vunpack.c.l.b16 %v287
        %v362 = vunpack.c.l.b16 %v288
        %v363 = vunpack.c.l.b16 %v289
        %v364 = vunpack.c.l.b16 %v290
        %v365 = vpack.c.b16 %v334, %v333
        %v366 = vpack.c.b16 %v336, %v335
        %v367 = vpack.c.b16 %v338, %v337
        %v368 = vpack.c.b16 %v340, %v339
        %v369 = vpack.c.b16 %v342, %v341
        %v370 = vpack.c.b16 %v344, %v343
        %v371 = vpack.c.b16 %v346, %v345
        %v372 = vpack.c.b16 %v348, %v347
        %v373 = vpack.c.b16 %v350, %v349
        %v374 = vpack.c.b16 %v352, %v351
        %v375 = vpack.c.b16 %v354, %v353
        %v376 = vpack.c.b16 %v356, %v355
        %v377 = vpack.c.b16 %v358, %v357
        %v378 = vpack.c.b16 %v360, %v359
        %v379 = vpack.c.b16 %v362, %v361
        %v380 = vpack.c.b16 %v364, %v363
        %v391 = vunpack.c.l.b16 %v291
        %v392 = vunpack.c.l.b16 %v292
        %v393 = vunpack.c.l.b16 %v293
        %v394 = vunpack.c.l.b16 %v294
        %v395 = vunpack.c.l.b16 %v295
        %v396 = vunpack.c.l.b16 %v296
        %v397 = vunpack.c.l.b16 %v297
        %v398 = vunpack.c.l.b16 %v298
        %v399 = vunpack.c.l.b16 %v299
        %v400 = vunpack.c.l.b16 %v300
        %v401 = vpack.c.b16 %v392, %v391
        %v402 = vpack.c.b16 %v394, %v393
        %v403 = vpack.c.b16 %v396, %v395
        %v404 = vpack.c.b16 %v398, %v397
        %v405 = vpack.c.b16 %v400, %v399
        %vm410 = vcmask 613376
        %v412 = vsel %vm410, %v365, 0
        %v415 = vsel %vm410, %v366, 0
        %v418 = vsel %vm410, %v367, 0
        %v421 = vsel %vm410, %v368, 0
        %v424 = vsel %vm410, %v369, 0
        %v427 = vsel %vm410, %v370, 0
        %v430 = vsel %vm410, %v371, 0
        %v433 = vsel %vm410, %v372, 0
        %v436 = vsel %vm410, %v373, 0
        %v439 = vsel %vm410, %v374, 0
        %v442 = vsel %vm410, %v375, 0
        %v445 = vsel %vm410, %v376, 0
        %v448 = vsel %vm410, %v377, 0
        %v451 = vsel %vm410, %v378, 0
        %v454 = vsel %vm410, %v379, 0
        %v457 = vsel %vm410, %v380, 0
        %vm459 = vcmask 1044480
        %vm460 = vcmask 1045504
        %v461 = vsel %vm459, 4294967295, 65535
        %v462 = vsel %vm460, %v461, 0
        %v464 = vand.u32 %v405, %v462
        %466 = vmatprep.subr.bf16.mxu0 0
        %467 = vmatpush1.bf16.msra.mxu0 %v401
        %468 = vmatprep.subr.bf16.mxu0 0
        %469 = vmatpush1.bf16.msra.mxu0 %v402
        %470 = vmatprep.subr.bf16.mxu0 0
        %471 = vmatpush1.bf16.msra.mxu0 %v403
        %472 = vmatprep.subr.bf16.mxu0 0
        %473 = vmatpush1.bf16.msra.mxu0 %v404
        %474 = vmatprep.subr.bf16.mxu0 0
        %475 = vmatpush1.bf16.msra.mxu0 %v464
        %476 = vmatprep.subr.bf16.mxu0 0
        %477 = vmatpush1.bf16.msra.mxu0 0
        %478 = vmatprep.subr.bf16.mxu0 0
        %479 = vmatpush1.bf16.msra.mxu0 0
        %480 = vmatprep.subr.bf16.mxu0 0
        %481 = vmatpush1.bf16.msra.mxu0 0
        %482 = vmatprep.subr.bf16.mxu0 0
        %483 = vmatpush1.bf16.msra.mxu0 0
        %484 = vmatprep.subr.bf16.mxu0 0
        %485 = vmatpush1.bf16.msra.mxu0 0
        %486 = vmatprep.subr.bf16.mxu0 0
        %487 = vmatpush1.bf16.msra.mxu0 0
        %488 = vmatprep.subr.bf16.mxu0 0
        %489 = vmatpush1.bf16.msra.mxu0 0
        %490 = vmatprep.subr.bf16.mxu0 0
        %491 = vmatpush1.bf16.msra.mxu0 0
        %492 = vmatprep.subr.bf16.mxu0 0
        %493 = vmatpush1.bf16.msra.mxu0 0
        %494 = vmatprep.subr.bf16.mxu0 0
        %495 = vmatpush1.bf16.msra.mxu0 0
        %496 = vmatprep.subr.bf16.mxu0 0
        %497 = vmatpush1.bf16.msra.mxu0 0
        %498 = vmatprep.mubr.bf16.mxu0 0
        %499 = vmatmul.mubr.bf16.gmra.mrb[0].mxu0 %v412
        %v500 = vpop.f32.mrb[0].mxu0
        %v501 = vadd.f32 0.0, %v500
        %v502 = vpop.f32.mrb[0].mxu0
        %v503 = vpop.f32.mrb[0].mxu0
        %v504 = vadd.f32 0.0, %v503
        %v505 = vpop.f32.mrb[0].mxu0
        %506 = vmatprep.mubr.bf16.mxu0 0
        %507 = vmatmul.mubr.bf16.gmra.mrb[0].mxu0 %v415
        %v508 = vpop.f32.mrb[0].mxu0
        %v509 = vadd.f32 0.0, %v508
        %v510 = vpop.f32.mrb[0].mxu0
        %v511 = vpop.f32.mrb[0].mxu0
        %v512 = vadd.f32 0.0, %v511
        %v513 = vpop.f32.mrb[0].mxu0
        %514 = vmatprep.mubr.bf16.mxu0 0
        %515 = vmatmul.mubr.bf16.gmra.mrb[0].mxu0 %v418
        %v516 = vpop.f32.mrb[0].mxu0
        %v517 = vadd.f32 0.0, %v516
        %v518 = vpop.f32.mrb[0].mxu0
        %v519 = vpop.f32.mrb[0].mxu0
        %v520 = vadd.f32 0.0, %v519
        %v521 = vpop.f32.mrb[0].mxu0
        %522 = vmatprep.mubr.bf16.mxu0 0
        %523 = vmatmul.mubr.bf16.gmra.mrb[0].mxu0 %v421
        %v524 = vpop.f32.mrb[0].mxu0
        %v525 = vadd.f32 0.0, %v524
        %v526 = vpop.f32.mrb[0].mxu0
        %v527 = vpop.f32.mrb[0].mxu0
        %v528 = vadd.f32 0.0, %v527
        %v529 = vpop.f32.mrb[0].mxu0
        %530 = vmatprep.mubr.bf16.mxu0 0
        %531 = vmatmul.mubr.bf16.gmra.mrb[0].mxu0 %v424
        %v532 = vpop.f32.mrb[0].mxu0
        %v533 = vadd.f32 0.0, %v532
        %v534 = vpop.f32.mrb[0].mxu0
        %v535 = vpop.f32.mrb[0].mxu0
        %v536 = vadd.f32 0.0, %v535
        %v537 = vpop.f32.mrb[0].mxu0
        %538 = vmatprep.mubr.bf16.mxu0 0
        %539 = vmatmul.mubr.bf16.gmra.mrb[0].mxu0 %v427
        %v540 = vpop.f32.mrb[0].mxu0
        %v541 = vadd.f32 0.0, %v540
        %v542 = vpop.f32.mrb[0].mxu0
        %v543 = vpop.f32.mrb[0].mxu0
        %v544 = vadd.f32 0.0, %v543
        %v545 = vpop.f32.mrb[0].mxu0
        %546 = vmatprep.mubr.bf16.mxu0 0
        %547 = vmatmul.mubr.bf16.gmra.mrb[0].mxu0 %v430
        %v548 = vpop.f32.mrb[0].mxu0
        %v549 = vadd.f32 0.0, %v548
        %v550 = vpop.f32.mrb[0].mxu0
        %v551 = vpop.f32.mrb[0].mxu0
        %v552 = vadd.f32 0.0, %v551
        %v553 = vpop.f32.mrb[0].mxu0
        %554 = vmatprep.mubr.bf16.mxu0 0
        %555 = vmatmul.mubr.bf16.gmra.mrb[0].mxu0 %v433
        %v556 = vpop.f32.mrb[0].mxu0
        %v557 = vadd.f32 0.0, %v556
        %v558 = vpop.f32.mrb[0].mxu0
        %v559 = vpop.f32.mrb[0].mxu0
        %v560 = vadd.f32 0.0, %v559
        %v561 = vpop.f32.mrb[0].mxu0
        %562 = vmatprep.mubr.bf16.mxu0 0
        %563 = vmatmul.mubr.bf16.gmra.mrb[0].mxu0 %v436
        %v564 = vpop.f32.mrb[0].mxu0
        %v565 = vadd.f32 0.0, %v564
        %v566 = vpop.f32.mrb[0].mxu0
        %v567 = vpop.f32.mrb[0].mxu0
        %v568 = vadd.f32 0.0, %v567
        %v569 = vpop.f32.mrb[0].mxu0
        %570 = vmatprep.mubr.bf16.mxu0 0
        %571 = vmatmul.mubr.bf16.gmra.mrb[0].mxu0 %v439
        %v572 = vpop.f32.mrb[0].mxu0
        %v573 = vadd.f32 0.0, %v572
        %v574 = vpop.f32.mrb[0].mxu0
        %v575 = vpop.f32.mrb[0].mxu0
        %v576 = vadd.f32 0.0, %v575
        %v577 = vpop.f32.mrb[0].mxu0
        %578 = vmatprep.mubr.bf16.mxu0 0
        %579 = vmatmul.mubr.bf16.gmra.mrb[0].mxu0 %v442
        %v580 = vpop.f32.mrb[0].mxu0
        %v581 = vadd.f32 0.0, %v580
        %v582 = vpop.f32.mrb[0].mxu0
        %v583 = vpop.f32.mrb[0].mxu0
        %v584 = vadd.f32 0.0, %v583
        %v585 = vpop.f32.mrb[0].mxu0
        %586 = vmatprep.mubr.bf16.mxu0 0
        %587 = vmatmul.mubr.bf16.gmra.mrb[0].mxu0 %v445
        %v588 = vpop.f32.mrb[0].mxu0
        %v589 = vadd.f32 0.0, %v588
        %v590 = vpop.f32.mrb[0].mxu0
        %v591 = vpop.f32.mrb[0].mxu0
        %v592 = vadd.f32 0.0, %v591
        %v593 = vpop.f32.mrb[0].mxu0
        %594 = vmatprep.mubr.bf16.mxu0 0
        %595 = vmatmul.mubr.bf16.gmra.mrb[0].mxu0 %v448
        %v596 = vpop.f32.mrb[0].mxu0
        %v597 = vadd.f32 0.0, %v596
        %v598 = vpop.f32.mrb[0].mxu0
        %v599 = vpop.f32.mrb[0].mxu0
        %v600 = vadd.f32 0.0, %v599
        %v601 = vpop.f32.mrb[0].mxu0
        %602 = vmatprep.mubr.bf16.mxu0 0
        %603 = vmatmul.mubr.bf16.gmra.mrb[0].mxu0 %v451
        %v604 = vpop.f32.mrb[0].mxu0
        %v605 = vadd.f32 0.0, %v604
        %v606 = vpop.f32.mrb[0].mxu0
        %v607 = vpop.f32.mrb[0].mxu0
        %v608 = vadd.f32 0.0, %v607
        %v609 = vpop.f32.mrb[0].mxu0
        %610 = vmatprep.mubr.bf16.mxu0 0
        %611 = vmatmul.mubr.bf16.gmra.mrb[0].mxu0 %v454
        %v612 = vpop.f32.mrb[0].mxu0
        %v613 = vadd.f32 0.0, %v612
        %v614 = vpop.f32.mrb[0].mxu0
        %v615 = vpop.f32.mrb[0].mxu0
        %v616 = vadd.f32 0.0, %v615
        %v617 = vpop.f32.mrb[0].mxu0
        %618 = vmatprep.mubr.bf16.mxu0 0
        %619 = vmatmul.mubr.bf16.gmra.mrb[0].mxu0 %v457
        %v620 = vpop.f32.mrb[0].mxu0
        %v621 = vadd.f32 0.0, %v620
        %v622 = vpop.f32.mrb[0].mxu0
        %v623 = vpop.f32.mrb[0].mxu0
        %v624 = vadd.f32 0.0, %v623
        %v625 = vpop.f32.mrb[0].mxu0
        %626 = vdwg.mxu0
        %vm627 = vcmask 523264
        %628 = vst.msk [vmem:[%s257] sm:$0xff] %vm627, %v501
        %629 = vst.msk [vmem:[%s257 + $0x8] sm:$0xff] %vm627, %v504
        %630 = vst.msk [vmem:[%s257 + $0x10] sm:$0xff] %vm627, %v509
        %631 = vst.msk [vmem:[%s257 + $0x18] sm:$0xff] %vm627, %v512
        %632 = vst.msk [vmem:[%s257 + $0x20] sm:$0xff] %vm627, %v517
        %633 = vst.msk [vmem:[%s257 + $0x28] sm:$0xff] %vm627, %v520
        %634 = vst.msk [vmem:[%s257 + $0x30] sm:$0xff] %vm627, %v525
        %635 = vst.msk [vmem:[%s257 + $0x38] sm:$0xff] %vm627, %v528
        %636 = vst.msk [vmem:[%s257 + $0x40] sm:$0xff] %vm627, %v533
        %637 = vst.msk [vmem:[%s257 + $0x48] sm:$0xff] %vm627, %v536
        %638 = vst.msk [vmem:[%s257 + $0x50] sm:$0xff] %vm627, %v541
        %639 = vst.msk [vmem:[%s257 + $0x58] sm:$0xff] %vm627, %v544
        %640 = vst.msk [vmem:[%s257 + $0x60] sm:$0xff] %vm627, %v549
        %641 = vst.msk [vmem:[%s257 + $0x68] sm:$0xff] %vm627, %v552
        %642 = vst.msk [vmem:[%s257 + $0x70] sm:$0xff] %vm627, %v557
        %643 = vst.msk [vmem:[%s257 + $0x78] sm:$0xff] %vm627, %v560
        %644 = vst.msk [vmem:[%s257 + $0x80] sm:$0xff] %vm627, %v565
        %645 = vst.msk [vmem:[%s257 + $0x88] sm:$0xff] %vm627, %v568
        %646 = vst.msk [vmem:[%s257 + $0x90] sm:$0xff] %vm627, %v573
        %647 = vst.msk [vmem:[%s257 + $0x98] sm:$0xff] %vm627, %v576
        %648 = vst.msk [vmem:[%s257 + $0xa0] sm:$0xff] %vm627, %v581
        %649 = vst.msk [vmem:[%s257 + $0xa8] sm:$0xff] %vm627, %v584
        %650 = vst.msk [vmem:[%s257 + $0xb0] sm:$0xff] %vm627, %v589
        %651 = vst.msk [vmem:[%s257 + $0xb8] sm:$0xff] %vm627, %v592
        %652 = vst.msk [vmem:[%s257 + $0xc0] sm:$0xff] %vm627, %v597
        %653 = vst.msk [vmem:[%s257 + $0xc8] sm:$0xff] %vm627, %v600
        %654 = vst.msk [vmem:[%s257 + $0xd0] sm:$0xff] %vm627, %v605
        %655 = vst.msk [vmem:[%s257 + $0xd8] sm:$0xff] %vm627, %v608
        %656 = vst.msk [vmem:[%s257 + $0xe0] sm:$0xff] %vm627, %v613
        %657 = vst.msk [vmem:[%s257 + $0xe8] sm:$0xff] %vm627, %v616
        %658 = vst.msk [vmem:[%s257 + $0xf0] sm:$0xff] %vm627, %v621
        %659 = vst.msk [vmem:[%s257 + $0xf8] sm:$0xff] %vm627, %v624
        %v660 = vsel %vm627, %v501, 0.0
        %v661 = vsel %vm627, %v504, 0.0
        %v662 = vadd.f32 %v660, %v661
        %v663 = vsel %vm627, %v509, 0.0
        %v664 = vadd.f32 %v662, %v663
        %v665 = vsel %vm627, %v512, 0.0
        %v666 = vadd.f32 %v664, %v665
        %v667 = vsel %vm627, %v517, 0.0
        %v668 = vadd.f32 %v666, %v667
        %v669 = vsel %vm627, %v520, 0.0
        %v670 = vadd.f32 %v668, %v669
        %v671 = vsel %vm627, %v525, 0.0
        %v672 = vadd.f32 %v670, %v671
        %v673 = vsel %vm627, %v528, 0.0
        %v674 = vadd.f32 %v672, %v673
        %v675 = vsel %vm627, %v533, 0.0
        %v676 = vadd.f32 %v674, %v675
        %v677 = vsel %vm627, %v536, 0.0
        %v678 = vadd.f32 %v676, %v677
        %v679 = vsel %vm627, %v541, 0.0
        %v680 = vadd.f32 %v678, %v679
        %v681 = vsel %vm627, %v544, 0.0
        %v682 = vadd.f32 %v680, %v681
        %v683 = vsel %vm627, %v549, 0.0
        %v684 = vadd.f32 %v682, %v683
        %v685 = vsel %vm627, %v552, 0.0
        %v686 = vadd.f32 %v684, %v685
        %v687 = vsel %vm627, %v557, 0.0
        %v688 = vadd.f32 %v686, %v687
        %v689 = vsel %vm627, %v560, 0.0
        %v690 = vadd.f32 %v688, %v689
        %v691 = vsel %vm627, %v565, 0.0
        %v692 = vadd.f32 %v690, %v691
        %v693 = vsel %vm627, %v568, 0.0
        %v694 = vadd.f32 %v692, %v693
        %v695 = vsel %vm627, %v573, 0.0
        %v696 = vadd.f32 %v694, %v695
        %v697 = vsel %vm627, %v576, 0.0
        %v698 = vadd.f32 %v696, %v697
        %v699 = vsel %vm627, %v581, 0.0
        %v700 = vadd.f32 %v698, %v699
        %v701 = vsel %vm627, %v584, 0.0
        %v702 = vadd.f32 %v700, %v701
        %v703 = vsel %vm627, %v589, 0.0
        %v704 = vadd.f32 %v702, %v703
        %v705 = vsel %vm627, %v592, 0.0
        %v706 = vadd.f32 %v704, %v705
        %v707 = vsel %vm627, %v597, 0.0
        %v708 = vadd.f32 %v706, %v707
        %v709 = vsel %vm627, %v600, 0.0
        %v710 = vadd.f32 %v708, %v709
        %v711 = vsel %vm627, %v605, 0.0
        %v712 = vadd.f32 %v710, %v711
        %v713 = vsel %vm627, %v608, 0.0
        %v714 = vadd.f32 %v712, %v713
        %v715 = vsel %vm627, %v613, 0.0
        %v716 = vadd.f32 %v714, %v715
        %v717 = vsel %vm627, %v616, 0.0
        %v718 = vadd.f32 %v716, %v717
        %v719 = vsel %vm627, %v621, 0.0
        %v720 = vadd.f32 %v718, %v719
        %v721 = vsel %vm627, %v624, 0.0
        %v722 = vadd.f32 %v720, %v721
        %v723 = vrot.slane %v722, 4
        %v724 = vadd.f32 %v722, %v723
        %v725 = vrot.slane %v724, 2
        %v726 = vadd.f32 %v724, %v725
        %v727 = vrot.slane %v726, 1
        %v728 = vadd.f32 %v726, %v727
        %vm729 = vcmask 516096
        %730 = vst.msk [vmem:[%s234] sm:$0x1] %vm729, %v728
        %v731 = vmul.f32 %v501, %v501
        %v732 = vmul.f32 %v504, %v504
        %v733 = vmul.f32 %v509, %v509
        %v734 = vmul.f32 %v512, %v512
        %v735 = vmul.f32 %v517, %v517
        %v736 = vmul.f32 %v520, %v520
        %v737 = vmul.f32 %v525, %v525
        %v738 = vmul.f32 %v528, %v528
        %v739 = vmul.f32 %v533, %v533
        %v740 = vmul.f32 %v536, %v536
        %v741 = vmul.f32 %v541, %v541
        %v742 = vmul.f32 %v544, %v544
        %v743 = vmul.f32 %v549, %v549
        %v744 = vmul.f32 %v552, %v552
        %v745 = vmul.f32 %v557, %v557
        %v746 = vmul.f32 %v560, %v560
        %v747 = vmul.f32 %v565, %v565
        %v748 = vmul.f32 %v568, %v568
        %v749 = vmul.f32 %v573, %v573
        %v750 = vmul.f32 %v576, %v576
        %v751 = vmul.f32 %v581, %v581
        %v752 = vmul.f32 %v584, %v584
        %v753 = vmul.f32 %v589, %v589
        %v754 = vmul.f32 %v592, %v592
        %v755 = vmul.f32 %v597, %v597
        %v756 = vmul.f32 %v600, %v600
        %v757 = vmul.f32 %v605, %v605
        %v758 = vmul.f32 %v608, %v608
        %v759 = vmul.f32 %v613, %v613
        %v760 = vmul.f32 %v616, %v616
        %v761 = vmul.f32 %v621, %v621
        %v762 = vmul.f32 %v624, %v624
        %v763 = vsel %vm627, %v731, 0.0
        %v764 = vsel %vm627, %v732, 0.0
        %v765 = vadd.f32 %v763, %v764
        %v766 = vsel %vm627, %v733, 0.0
        %v767 = vadd.f32 %v765, %v766
        %v768 = vsel %vm627, %v734, 0.0
        %v769 = vadd.f32 %v767, %v768
        %v770 = vsel %vm627, %v735, 0.0
        %v771 = vadd.f32 %v769, %v770
        %v772 = vsel %vm627, %v736, 0.0
        %v773 = vadd.f32 %v771, %v772
        %v774 = vsel %vm627, %v737, 0.0
        %v775 = vadd.f32 %v773, %v774
        %v776 = vsel %vm627, %v738, 0.0
        %v777 = vadd.f32 %v775, %v776
        %v778 = vsel %vm627, %v739, 0.0
        %v779 = vadd.f32 %v777, %v778
        %v780 = vsel %vm627, %v740, 0.0
        %v781 = vadd.f32 %v779, %v780
        %v782 = vsel %vm627, %v741, 0.0
        %v783 = vadd.f32 %v781, %v782
        %v784 = vsel %vm627, %v742, 0.0
        %v785 = vadd.f32 %v783, %v784
        %v786 = vsel %vm627, %v743, 0.0
        %v787 = vadd.f32 %v785, %v786
        %v788 = vsel %vm627, %v744, 0.0
        %v789 = vadd.f32 %v787, %v788
        %v790 = vsel %vm627, %v745, 0.0
        %v791 = vadd.f32 %v789, %v790
        %v792 = vsel %vm627, %v746, 0.0
        %v793 = vadd.f32 %v791, %v792
        %v794 = vsel %vm627, %v747, 0.0
        %v795 = vadd.f32 %v793, %v794
        %v796 = vsel %vm627, %v748, 0.0
        %v797 = vadd.f32 %v795, %v796
        %v798 = vsel %vm627, %v749, 0.0
        %v799 = vadd.f32 %v797, %v798
        %v800 = vsel %vm627, %v750, 0.0
        %v801 = vadd.f32 %v799, %v800
        %v802 = vsel %vm627, %v751, 0.0
        %v803 = vadd.f32 %v801, %v802
        %v804 = vsel %vm627, %v752, 0.0
        %v805 = vadd.f32 %v803, %v804
        %v806 = vsel %vm627, %v753, 0.0
        %v807 = vadd.f32 %v805, %v806
        %v808 = vsel %vm627, %v754, 0.0
        %v809 = vadd.f32 %v807, %v808
        %v810 = vsel %vm627, %v755, 0.0
        %v811 = vadd.f32 %v809, %v810
        %v812 = vsel %vm627, %v756, 0.0
        %v813 = vadd.f32 %v811, %v812
        %v814 = vsel %vm627, %v757, 0.0
        %v815 = vadd.f32 %v813, %v814
        %v816 = vsel %vm627, %v758, 0.0
        %v817 = vadd.f32 %v815, %v816
        %v818 = vsel %vm627, %v759, 0.0
        %v819 = vadd.f32 %v817, %v818
        %v820 = vsel %vm627, %v760, 0.0
        %v821 = vadd.f32 %v819, %v820
        %v822 = vsel %vm627, %v761, 0.0
        %v823 = vadd.f32 %v821, %v822
        %v824 = vsel %vm627, %v762, 0.0
        %v825 = vadd.f32 %v823, %v824
        %v826 = vrot.slane %v825, 4
        %v827 = vadd.f32 %v825, %v826
        %v828 = vrot.slane %v827, 2
        %v829 = vadd.f32 %v827, %v828
        %v830 = vrot.slane %v829, 1
        %v831 = vadd.f32 %v829, %v830
        %832 = vst.msk [vmem:[%s240] sm:$0x1] %vm729, %v831
        %p833 = scmp.lt.s32.totalorder %s26, 1
        %s834 = scalar_select %p833, %s26, 1
        %p835 = scmp.lt.s32.totalorder %s27, 0
        %s836 = scalar_select %p835, %s27, 0
        %s837 = smul.addr %s834, 32
        %s838 = sadd.s32 %s836, %s837
        %s839 = smul.addr %s838, 8
        %s840 = scalar_lea.vmem %s2, %s839
        %s841 = sand.u32 %s124, 1
        %s842 = scalar_lea.sflag [#allocation3], %s841
        %s843 = sand.u32 %s124, 1
        %s844 = scalar_lea.vmem [#allocation2], %s843
        %s845 = sand.u32 %s152, 1
        %s846 = scalar_lea.sflag [#allocation5], %s845
        %s847 = sand.u32 %s152, 1
        %s848 = scalar_lea.vmem [#allocation4], %s847
        // Predicated region
        $region29: #{tpu_custom_call.1} parent=27 // pred_check
          %p849 = pneg %p106
        $region30: #{tpu_custom_call.1} parent=27 // pred_check_branch
          %851 = sbr.rel (%p849) target = $region32
        $region31: #{tpu_custom_call.1} parent=27 // pred_region
          _
        $region32: #{tpu_custom_call.1} parent=27 // pred_fallthru
          _
        // Predicated region
        $region33: #{tpu_custom_call.1} parent=27 // pred_check
          %p852 = pneg %p134
        $region34: #{tpu_custom_call.1} parent=27 // pred_check_branch
          %854 = sbr.rel (%p852) target = $region36
        $region35: #{tpu_custom_call.1} parent=27 // pred_region
          %s856 = ssub.s32 16, 16
          %857 = vsyncadd %s842, %s856
          %s858 = sadd.s32 %s27, %s26
          %s859 = smul.addr %s858, 16
          %s860 = scalar_lea.hbm %s3, %s859
          %s862 = sshll.u32 %s844, 4
          %s863 = int_to_ptr.vmem [resolvable:$true] %s862
          %865 = dma.vmem_to_hbm [thread:$0]  %s863, 16, %s860, %s842
        $region36: #{tpu_custom_call.1} parent=27 // pred_fallthru
          _
        // Predicated region
        $region37: #{tpu_custom_call.1} parent=27 // pred_check
          %p866 = pneg %p162
        $region38: #{tpu_custom_call.1} parent=27 // pred_check_branch
          %868 = sbr.rel (%p866) target = $region40
        $region39: #{tpu_custom_call.1} parent=27 // pred_region
          %s870 = ssub.s32 16, 16
          %871 = vsyncadd %s846, %s870
          %s872 = sadd.s32 %s27, %s26
          %s873 = smul.addr %s872, 16
          %s874 = scalar_lea.hbm %s4, %s873
          %s876 = sshll.u32 %s848, 4
          %s877 = int_to_ptr.vmem [resolvable:$true] %s876
          %879 = dma.vmem_to_hbm [thread:$0]  %s877, 16, %s874, %s846
        $region40: #{tpu_custom_call.1} parent=27 // pred_fallthru
          _
      $region28: #{tpu_custom_call.1} parent=5 // pred_fallthru
        _
      %p880 = scmp.le.s32.totalorder 2, %s17
      // Predicated region
      $region41: #{tpu_custom_call.1} parent=5 // pred_check
        %p881 = pneg %p880
      $region42: #{tpu_custom_call.1} parent=5 // pred_check_branch
        %883 = sbr.rel (%p881) target = $region44
      $region43: #{tpu_custom_call.1} parent=5 // pred_region
        %s884 = ssub.s32 %s17, 2
        // Predicated region
        $region45: #{tpu_custom_call.1} parent=43 // pred_check
          %p885 = pneg %p112
        $region46: #{tpu_custom_call.1} parent=43 // pred_check_branch
          %887 = sbr.rel (%p885) target = $region48
        $region47: #{tpu_custom_call.1} parent=43 // pred_region
          %p888 = scmp.lt.s32.totalorder %s28, 1
          %s889 = scalar_select %p888, %s28, 1
          %p890 = scmp.lt.s32.totalorder %s29, 0
          %s891 = scalar_select %p890, %s29, 0
          %s892 = smul.addr %s889, 32
          %s893 = sadd.s32 %s891, %s892
          %s894 = smul.addr %s893, 8
          %s895 = scalar_lea.vmem %s2, %s894
        $region48: #{tpu_custom_call.1} parent=43 // pred_fallthru
          _
        // Predicated region
        $region49: #{tpu_custom_call.1} parent=43 // pred_check
          %p896 = pneg %p140
        $region50: #{tpu_custom_call.1} parent=43 // pred_check_branch
          %898 = sbr.rel (%p896) target = $region52
        $region51: #{tpu_custom_call.1} parent=43 // pred_region
          %s899 = sand.u32 %s125, 1
          %s900 = scalar_lea.sflag [#allocation3], %s899
          %s901 = sand.u32 %s125, 1
          %s902 = scalar_lea.vmem [#allocation2], %s901
          %903 = dma.done %s900, 16
        $region52: #{tpu_custom_call.1} parent=43 // pred_fallthru
          _
        // Predicated region
        $region53: #{tpu_custom_call.1} parent=43 // pred_check
          %p904 = pneg %p168
        $region54: #{tpu_custom_call.1} parent=43 // pred_check_branch
          %906 = sbr.rel (%p904) target = $region56
        $region55: #{tpu_custom_call.1} parent=43 // pred_region
          %s907 = sand.u32 %s153, 1
          %s908 = scalar_lea.sflag [#allocation5], %s907
          %s909 = sand.u32 %s153, 1
          %s910 = scalar_lea.vmem [#allocation4], %s909
          %911 = dma.done %s908, 16
        $region56: #{tpu_custom_call.1} parent=43 // pred_fallthru
          _
      $region44: #{tpu_custom_call.1} parent=5 // pred_fallthru
        _
    $region6: #{tpu_custom_call.1} parent=1 // loop_footer
      %s21 = sadd.s32 1, %s17
    $region7: #{tpu_custom_call.1} parent=1 // loop_footer_branch
      %16 = sbr.rel target = $region3
    $region8: #{tpu_custom_call.1} parent=1 // loop_exit
      _
    %912 = vsyncpa [#allocation3], 1
    %s913 = scalar_lea.sflag [#allocation3], 1
    %914 = vsyncpa %s913, 1
    %915 = vsyncpa [#allocation5], 1
    %s916 = scalar_lea.sflag [#allocation5], 1
    %917 = vsyncpa %s916, 1

</llo_original>
